<compile_context>
chip_gen: v6e
topology: v6e:2x2x1
jax: 0.10.0
libtpu: 0.0.40
codegen_flags: <defaults>
</compile_context>

<pallas_src>
import functools

import jax
import jax.numpy as jnp
from jax import lax
from jax.experimental import pallas as pl
from jax.experimental.pallas import tpu as pltpu


# ----------------------------- budgets / tiling ------------------------------

def _vmem_limit_bytes():
    """Generation-aware scoped-VMEM budget (headroom for double buffers)."""
    cap = 64 * 1024 * 1024
    try:
        cap = int(pltpu.get_tpu_info().vmem_capacity_bytes)
    except Exception:
        pass
    return max(32 * 1024 * 1024, min(int(cap * 0.55), 96 * 1024 * 1024))


def _choose_tile_n(n, m, vmem_limit):
    """Pick the N tile (and padded N) for the fused route+conv pipeline.

    The k-NN loop keeps ~6 live (M, TN) f32 temporaries (~24*M*TN bytes plus
    slack); cap that at roughly half the scoped VMEM budget so the pipeline's
    double-buffered activation tiles still fit.
    """
    if n <= 512:
        return n, n                     # single full tile per batch element
    budget = vmem_limit // 2
    cap_cols = max(128, budget // max(1, 28 * m))
    tile = 128
    while tile * 2 <= min(cap_cols, 2048) and tile * 2 <= n:
        tile *= 2
    n_pad = ((n + tile - 1) // tile) * tile
    return tile, n_pad


def _grid_params(vmem_limit):
    return pltpu.CompilerParams(
        dimension_semantics=("parallel", "parallel"),
        vmem_limit_bytes=vmem_limit)


# ------------------- kernel 1: route (k-NN interp) + conv0 -------------------

def _route_conv0_kernel(ori_xyz_ref, ori_x_ref, sub_xyz_ref, sub_x_ref,
                        w_ori_ref, w_sub_ref, y_ref, stats_ref,
                        *, k, eps, n_valid, tile_n, masked):
    q = ori_xyz_ref[0].astype(jnp.float32)                 # (3, TN)  queries
    st = jnp.transpose(sub_xyz_ref[0].astype(jnp.float32))  # (M, 3)  sources
    sub_x = sub_x_ref[0].astype(jnp.float32)               # (C_sub, M)
    ori_x = ori_x_ref[0].astype(jnp.float32)               # (C_ori, TN)
    m = st.shape[0]

    # d2[m, n] = ||s_m||^2 + ||q_n||^2 - 2 s_m.q_n : cross term on the MXU,
    # no (3, M, TN) broadcast intermediate; clamp kills tiny negatives.
    cross = jnp.dot(st, q, preferred_element_type=jnp.float32)     # (M, TN)
    s_sq = jnp.sum(st * st, axis=1, keepdims=True)                 # (M, 1)
    q_sq = jnp.sum(q * q, axis=0, keepdims=True)                   # (1, TN)
    d2 = jnp.maximum(s_sq + q_sq - 2.0 * cross, 0.0)               # (M, TN)

    # k rounds of masked argmin on squared distances; builds a weighted
    # selection matrix so interpolation is one MXU matmul (no gather).
    iota_m = lax.broadcasted_iota(jnp.int32, (m, 1), 0)            # (M, 1)
    sel = jnp.zeros(d2.shape, jnp.float32)
    wsum = jnp.zeros((1, d2.shape[1]), jnp.float32)
    work = d2
    big = jnp.float32(1e30)
    for _ in range(k):
        dmin = jnp.min(work, axis=0, keepdims=True)                # (1, TN)
        idx = jnp.min(jnp.where(work == dmin, iota_m, m), axis=0,
                      keepdims=True)                               # (1, TN)
        onehot = (iota_m == idx).astype(jnp.float32)               # (M, TN)
        w = 1.0 / (jnp.sqrt(dmin) + eps)                           # exact recip
        sel = sel + onehot * w
        wsum = wsum + w
        work = work + onehot * big
    sel = sel * (1.0 / wsum)                                       # exact norm

    # neighbor = sub_x @ sel ; y0 = W_ori @ ori_x + W_sub @ neighbor
    nbr = jnp.dot(sub_x, sel, preferred_element_type=jnp.float32)  # (C_sub, TN)
    y = jnp.dot(w_ori_ref[...].astype(jnp.float32), ori_x,
                preferred_element_type=jnp.float32)
    y = y + jnp.dot(w_sub_ref[...].astype(jnp.float32), nbr,
                    preferred_element_type=jnp.float32)            # (D0, TN)
    y_ref[0] = y.astype(y_ref.dtype)

    # partial BN stats for this tile (padded columns masked out).
    ym = y
    if masked:
        col = pl.program_id(1) * tile_n + lax.broadcasted_iota(
            jnp.int32, (1, tile_n), 1)
        ym = y * (col < n_valid).astype(jnp.float32)
    s1 = jnp.sum(ym, axis=1, keepdims=True)                        # (D0, 1)
    s2 = jnp.sum(ym * ym, axis=1, keepdims=True)                   # (D0, 1)
    stats_ref[0, 0] = jnp.concatenate([s1, s2], axis=1)            # (D0, 2)


def _route_conv0(ori_xyz, ori_x, sub_xyz, sub_x, w_ori, w_sub,
                 *, k, eps, tile_n, n_valid, vmem_limit):
    B, _, n_pad = ori_xyz.shape
    M = sub_xyz.shape[2]
    c_ori = ori_x.shape[1]
    c_sub = sub_x.shape[1]
    d0 = w_ori.shape[0]
    nt = n_pad // tile_n
    kern = functools.partial(_route_conv0_kernel, k=k, eps=eps,
                             n_valid=n_valid, tile_n=tile_n,
                             masked=(n_pad != n_valid))
    return pl.pallas_call(
        kern,
        out_shape=(jax.ShapeDtypeStruct((B, d0, n_pad), ori_x.dtype),
                   jax.ShapeDtypeStruct((B, nt, d0, 2), jnp.float32)),
        grid=(B, nt),
        in_specs=[
            pl.BlockSpec((1, 3, tile_n), lambda b, n: (b, 0, n)),
            pl.BlockSpec((1, c_ori, tile_n), lambda b, n: (b, 0, n)),
            pl.BlockSpec((1, 3, M), lambda b, n: (b, 0, 0)),
            pl.BlockSpec((1, c_sub, M), lambda b, n: (b, 0, 0)),
            pl.BlockSpec((d0, c_ori), lambda b, n: (0, 0)),
            pl.BlockSpec((d0, c_sub), lambda b, n: (0, 0)),
        ],
        out_specs=(
            pl.BlockSpec((1, d0, tile_n), lambda b, n: (b, 0, n)),
            pl.BlockSpec((1, 1, d0, 2), lambda b, n: (b, n, 0, 0)),
        ),
        compiler_params=_grid_params(vmem_limit),
    )(ori_xyz, ori_x, sub_xyz, sub_x, w_ori, w_sub)


# -------------- kernel 2: BN(prev) + ReLU + conv_i (tail layers) -------------

def _bn_relu_conv_kernel(y_ref, aff_ref, w_ref, out_ref, stats_ref,
                         *, n_valid, tile_n, masked):
    y = y_ref[0].astype(jnp.float32)                       # (D_prev, TN)
    aff = aff_ref[...].astype(jnp.float32)                 # (D_prev, 2)
    x = jnp.maximum(y * aff[:, 0:1] + aff[:, 1:2], 0.0)    # BN + ReLU
    z = jnp.dot(w_ref[...].astype(jnp.float32), x,
                preferred_element_type=jnp.float32)        # (D_i, TN)
    out_ref[0] = z.astype(out_ref.dtype)

    zm = z
    if masked:
        col = pl.program_id(1) * tile_n + lax.broadcasted_iota(
            jnp.int32, (1, tile_n), 1)
        zm = z * (col < n_valid).astype(jnp.float32)
    s1 = jnp.sum(zm, axis=1, keepdims=True)
    s2 = jnp.sum(zm * zm, axis=1, keepdims=True)
    stats_ref[0, 0] = jnp.concatenate([s1, s2], axis=1)    # (D_i, 2)


def _bn_relu_conv(y, aff, w, *, tile_n, n_valid, vmem_limit):
    B, dp, n_pad = y.shape
    di = w.shape[0]
    nt = n_pad // tile_n
    kern = functools.partial(_bn_relu_conv_kernel, n_valid=n_valid,
                             tile_n=tile_n, masked=(n_pad != n_valid))
    return pl.pallas_call(
        kern,
        out_shape=(jax.ShapeDtypeStruct((B, di, n_pad), y.dtype),
                   jax.ShapeDtypeStruct((B, nt, di, 2), jnp.float32)),
        grid=(B, nt),
        in_specs=[
            pl.BlockSpec((1, dp, tile_n), lambda b, n: (b, 0, n)),
            pl.BlockSpec((dp, 2), lambda b, n: (0, 0)),
            pl.BlockSpec((di, dp), lambda b, n: (0, 0)),
        ],
        out_specs=(
            pl.BlockSpec((1, di, tile_n), lambda b, n: (b, 0, n)),
            pl.BlockSpec((1, 1, di, 2), lambda b, n: (b, n, 0, 0)),
        ),
        compiler_params=_grid_params(vmem_limit),
    )(y, aff, w)


# ---------------------- kernel 3: final BN + ReLU ----------------------------

def _bn_relu_kernel(y_ref, aff_ref, out_ref):
    y = y_ref[0].astype(jnp.float32)
    aff = aff_ref[...].astype(jnp.float32)
    out_ref[0] = jnp.maximum(y * aff[:, 0:1] + aff[:, 1:2], 0.0
                             ).astype(out_ref.dtype)


def _bn_relu(y, aff, *, tile_n, vmem_limit):
    B, d, n_pad = y.shape
    nt = n_pad // tile_n
    return pl.pallas_call(
        _bn_relu_kernel,
        out_shape=jax.ShapeDtypeStruct((B, d, n_pad), y.dtype),
        grid=(B, nt),
        in_specs=[
            pl.BlockSpec((1, d, tile_n), lambda b, n: (b, 0, n)),
            pl.BlockSpec((d, 2), lambda b, n: (0, 0)),
        ],
        out_specs=pl.BlockSpec((1, d, tile_n), lambda b, n: (b, 0, n)),
        compiler_params=_grid_params(vmem_limit),
    )(y, aff)


# ----------------- BN finalize (tiny per-channel math in JAX) ----------------

def _bn_affine(stats, gamma, beta, count, bn_eps):
    s = jnp.sum(stats[..., 0], axis=(0, 1))                # (D,)
    ss = jnp.sum(stats[..., 1], axis=(0, 1))               # (D,)
    mean = s / count
    var = jnp.maximum(ss / count - mean * mean, 0.0)
    scale = gamma * lax.rsqrt(var + bn_eps)
    shift = beta - mean * scale
    return jnp.stack([scale, shift], axis=1)               # (D, 2)


# --------------------------------- module ------------------------------------

class UpBlock:
    """JAX/Pallas equivalent of the PyTorch UpBlock (forward pass only).

    BatchNorm uses training-mode per-call batch statistics (biased variance,
    no running stats), matching nn.BatchNorm1d in train() mode.
    """

    def __init__(self, in_dim, dims=(32, 32), k=3, eps=1e-5, bn_eps=1e-5,
                 key=None):
        self.k = k
        self.eps = eps
        self.bn_eps = bn_eps
        key = jax.random.PRNGKey(42) if key is None else key
        self.weights, self.gammas, self.betas = [], [], []
        prev = in_dim
        for d in dims:
            key, wk = jax.random.split(key)
            # nn.Conv1d(prev, d, 1, bias=False).weight squeezed to (d, prev)
            bound = 1.0 / (prev ** 0.5)
            self.weights.append(
                jax.random.uniform(wk, (d, prev), jnp.float32, -bound, bound))
            self.gammas.append(jnp.ones((d,), jnp.float32))   # BN weight
            self.betas.append(jnp.zeros((d,), jnp.float32))   # BN bias
            prev = d

    def __call__(self, ori_x, ori_xyz, sub_x, sub_xyz):
        B, c_ori, N = ori_x.shape
        M = sub_x.shape[2]
        assert M >= self.k, "need at least k source points"
        assert self.weights[0].shape[1] == c_ori + sub_x.shape[1]

        vmem_limit = _vmem_limit_bytes()
        tile_n, n_pad = _choose_tile_n(N, M, vmem_limit)
        if n_pad != N:
            pad = [(0, 0), (0, 0), (0, n_pad - N)]
            ori_x = jnp.pad(ori_x, pad)
            ori_xyz = jnp.pad(ori_xyz, pad)

        count = float(B * N)
        w0 = self.weights[0]
        # layer 0: route (k-NN interp) fused with conv0; concat never built.
        y, stats = _route_conv0(
            ori_xyz, ori_x, sub_xyz, sub_x, w0[:, :c_ori], w0[:, c_ori:],
            k=self.k, eps=self.eps, tile_n=tile_n, n_valid=N,
            vmem_limit=vmem_limit)
        aff = _bn_affine(stats, self.gammas[0], self.betas[0], count,
                         self.bn_eps)
        # tail layers: BN(prev)+ReLU fused with the next conv + its BN stats.
        for w, g, b in zip(self.weights[1:], self.gammas[1:], self.betas[1:]):
            y, stats = _bn_relu_conv(y, aff, w, tile_n=tile_n, n_valid=N,
                                     vmem_limit=vmem_limit)
            aff = _bn_affine(stats, g, b, count, self.bn_eps)
        out = _bn_relu(y, aff, tile_n=tile_n, vmem_limit=vmem_limit)
        return out[:, :, :N] if n_pad != N else out


# ---------------------------------- main --------------------------------------

if __name__ == "__main__":
    key = jax.random.PRNGKey(0)
    B, N, M = 2, 16, 8            # B batches, N dense points, M subsampled points
    C_ori, C_sub = 8, 16
    dims = (32, 32)
    k1, k2, k3, k4 = jax.random.split(key, 4)
    ori_x = jax.random.normal(k1, (B, C_ori, N), jnp.float32)
    ori_xyz = jax.random.normal(k2, (B, 3, N), jnp.float32)
    sub_x = jax.random.normal(k3, (B, C_sub, M), jnp.float32)
    sub_xyz = jax.random.normal(k4, (B, 3, M), jnp.float32)

    block = UpBlock(in_dim=C_ori + C_sub, dims=dims, k=3)
    out = block(ori_x, ori_xyz, sub_x, sub_xyz)
    out = jax.block_until_ready(out)
    assert out.shape == (B, dims[-1], N), out.shape
    assert bool(jnp.all(jnp.isfinite(out)))
    print("KERNEL_OK")
</pallas_src>

<mosaic_0001>
module attributes {stable_mosaic.version = 11 : i64} {
  func.func @_route_conv0_kernel(%arg0: i32, %arg1: i32, %arg2: memref<1x3x16xf32, #tpu.memory_space<vmem>>, %arg3: memref<1x8x16xf32, #tpu.memory_space<vmem>>, %arg4: memref<1x3x8xf32, #tpu.memory_space<vmem>>, %arg5: memref<1x16x8xf32, #tpu.memory_space<vmem>>, %arg6: memref<32x8xf32, #tpu.memory_space<vmem>>, %arg7: memref<32x16xf32, #tpu.memory_space<vmem>>, %arg8: memref<1x32x16xf32, #tpu.memory_space<vmem>>, %arg9: memref<1x1x32x2xf32, #tpu.memory_space<vmem>>) attributes {dimension_semantics = [#tpu.dimension_semantics<parallel>, #tpu.dimension_semantics<parallel>], iteration_bounds = array<i64: 2, 1>, scalar_prefetch = 0 : i64, scratch_operands = 0 : i64, tpu.core_type = #tpu.core_type<tc>, window_params = [{transform_indices = @transform_0, window_bounds = array<i64: 1, 3, 16>}, {transform_indices = @transform_1, window_bounds = array<i64: 1, 8, 16>}, {transform_indices = @transform_2, window_bounds = array<i64: 1, 3, 8>}, {transform_indices = @transform_3, window_bounds = array<i64: 1, 16, 8>}, {pipeline_mode = #tpu.pipeline_mode<synchronous>, transform_indices = @transform_4, window_bounds = array<i64: 32, 8>}, {pipeline_mode = #tpu.pipeline_mode<synchronous>, transform_indices = @transform_5, window_bounds = array<i64: 32, 16>}, {transform_indices = @transform_6, window_bounds = array<i64: 1, 32, 16>}, {transform_indices = @transform_7, window_bounds = array<i64: 1, 1, 32, 2>}]} {
    %c0 = arith.constant 0 : index
    %c0_0 = arith.constant 0 : index
    %c0_1 = arith.constant 0 : index
    %0 = vector.load %arg2[%c0, %c0_0, %c0_1] : memref<1x3x16xf32, #tpu.memory_space<vmem>>, vector<1x3x16xf32>
    %1 = vector.shape_cast %0 : vector<1x3x16xf32> to vector<3x16xf32>
    %c0_2 = arith.constant 0 : index
    %c0_3 = arith.constant 0 : index
    %c0_4 = arith.constant 0 : index
    %2 = vector.load %arg4[%c0_2, %c0_3, %c0_4] : memref<1x3x8xf32, #tpu.memory_space<vmem>>, vector<1x3x8xf32>
    %3 = vector.shape_cast %2 : vector<1x3x8xf32> to vector<3x8xf32>
    %4 = tpu.transpose %3, [1, 0] : vector<3x8xf32> -> vector<8x3xf32>
    %c0_5 = arith.constant 0 : index
    %c0_6 = arith.constant 0 : index
    %c0_7 = arith.constant 0 : index
    %5 = vector.load %arg5[%c0_5, %c0_6, %c0_7] : memref<1x16x8xf32, #tpu.memory_space<vmem>>, vector<1x16x8xf32>
    %6 = vector.shape_cast %5 : vector<1x16x8xf32> to vector<16x8xf32>
    %c0_8 = arith.constant 0 : index
    %c0_9 = arith.constant 0 : index
    %c0_10 = arith.constant 0 : index
    %7 = vector.load %arg3[%c0_8, %c0_9, %c0_10] : memref<1x8x16xf32, #tpu.memory_space<vmem>>, vector<1x8x16xf32>
    %8 = vector.shape_cast %7 : vector<1x8x16xf32> to vector<8x16xf32>
    %cst = arith.constant dense<0.000000e+00> : vector<8x16xf32>
    %9 = tpu.matmul %4, %1, %cst {dimension_numbers = #tpu.dot_dimension_numbers<[1], [0], [0], [1], [0, 0, 1, 1], [], []>} : vector<8x3xf32>, vector<3x16xf32>, vector<8x16xf32> -> vector<8x16xf32>
    %10 = arith.mulf %4, %4 : vector<8x3xf32>
    %cst_11 = arith.constant dense<0.000000e+00> : vector<8xf32>
    %11 = vector.multi_reduction <add>, %10, %cst_11 [1] : vector<8x3xf32> to vector<8xf32>
    %12 = vector.shape_cast %11 : vector<8xf32> to vector<8x1xf32>
    %13 = arith.mulf %1, %1 : vector<3x16xf32>
    %cst_12 = arith.constant dense<0.000000e+00> : vector<16xf32>
    %14 = vector.multi_reduction <add>, %13, %cst_12 [0] : vector<3x16xf32> to vector<16xf32>
    %15 = vector.shape_cast %14 : vector<16xf32> to vector<1x16xf32>
    %16 = vector.broadcast %12 : vector<8x1xf32> to vector<8x16xf32>
    %17 = vector.broadcast %15 : vector<1x16xf32> to vector<8x16xf32>
    %18 = arith.addf %16, %17 : vector<8x16xf32>
    %cst_13 = arith.constant 2.000000e+00 : f32
    %19 = vector.broadcast %cst_13 : f32 to vector<8x16xf32>
    %20 = arith.mulf %19, %9 : vector<8x16xf32>
    %21 = arith.subf %18, %20 : vector<8x16xf32>
    %cst_14 = arith.constant 0.000000e+00 : f32
    %22 = vector.broadcast %cst_14 : f32 to vector<8x16xf32>
    %23 = arith.maximumf %21, %22 : vector<8x16xf32>
    %24 = tpu.iota {dimensions = array<i32: 0>} : vector<8x1xi32>
    %cst_15 = arith.constant 0.000000e+00 : f32
    %25 = vector.broadcast %cst_15 : f32 to vector<8x16xf32>
    %cst_16 = arith.constant 0.000000e+00 : f32
    %26 = vector.broadcast %cst_16 : f32 to vector<1x16xf32>
    %cst_17 = arith.constant dense<0x7F800000> : vector<16xf32>
    %27 = vector.multi_reduction <minimumf>, %23, %cst_17 [0] : vector<8x16xf32> to vector<16xf32>
    %28 = vector.shape_cast %27 : vector<16xf32> to vector<1x16xf32>
    %29 = vector.broadcast %28 : vector<1x16xf32> to vector<8x16xf32>
    %30 = arith.cmpf oeq, %23, %29 : vector<8x16xf32>
    %c8_i32 = arith.constant 8 : i32
    %31 = vector.shape_cast %24 : vector<8x1xi32> to vector<8x1xi32>
    %32 = vector.broadcast %31 : vector<8x1xi32> to vector<8x16xi32>
    %33 = vector.broadcast %c8_i32 : i32 to vector<8x16xi32>
    %34 = arith.select %30, %32, %33 : vector<8x16xi1>, vector<8x16xi32>
    %cst_18 = arith.constant dense<2147483647> : vector<16xi32>
    %35 = vector.multi_reduction <minsi>, %34, %cst_18 [0] : vector<8x16xi32> to vector<16xi32>
    %36 = vector.shape_cast %35 : vector<16xi32> to vector<1x16xi32>
    %37 = vector.broadcast %24 : vector<8x1xi32> to vector<8x16xi32>
    %38 = vector.broadcast %36 : vector<1x16xi32> to vector<8x16xi32>
    %39 = arith.cmpi eq, %37, %38 : vector<8x16xi32>
    %40 = arith.extui %39 : vector<8x16xi1> to vector<8x16xi32>
    %41 = arith.sitofp %40 : vector<8x16xi32> to vector<8x16xf32>
    %42 = math.sqrt %28 : vector<1x16xf32>
    %cst_19 = arith.constant 9.99999974E-6 : f32
    %43 = vector.broadcast %cst_19 : f32 to vector<1x16xf32>
    %44 = arith.addf %42, %43 : vector<1x16xf32>
    %cst_20 = arith.constant 1.000000e+00 : f32
    %45 = vector.broadcast %cst_20 : f32 to vector<1x16xf32>
    %46 = arith.divf %45, %44 : vector<1x16xf32>
    %47 = vector.broadcast %46 : vector<1x16xf32> to vector<8x16xf32>
    %48 = arith.mulf %41, %47 : vector<8x16xf32>
    %49 = arith.addf %25, %48 : vector<8x16xf32>
    %50 = arith.addf %26, %46 : vector<1x16xf32>
    %cst_21 = arith.constant 1.000000e+30 : f32
    %51 = vector.broadcast %cst_21 : f32 to vector<8x16xf32>
    %52 = arith.mulf %41, %51 : vector<8x16xf32>
    %53 = arith.addf %23, %52 : vector<8x16xf32>
    %cst_22 = arith.constant dense<0x7F800000> : vector<16xf32>
    %54 = vector.multi_reduction <minimumf>, %53, %cst_22 [0] : vector<8x16xf32> to vector<16xf32>
    %55 = vector.shape_cast %54 : vector<16xf32> to vector<1x16xf32>
    %56 = vector.broadcast %55 : vector<1x16xf32> to vector<8x16xf32>
    %57 = arith.cmpf oeq, %53, %56 : vector<8x16xf32>
    %c8_i32_23 = arith.constant 8 : i32
    %58 = vector.shape_cast %24 : vector<8x1xi32> to vector<8x1xi32>
    %59 = vector.broadcast %58 : vector<8x1xi32> to vector<8x16xi32>
    %60 = vector.broadcast %c8_i32_23 : i32 to vector<8x16xi32>
    %61 = arith.select %57, %59, %60 : vector<8x16xi1>, vector<8x16xi32>
    %cst_24 = arith.constant dense<2147483647> : vector<16xi32>
    %62 = vector.multi_reduction <minsi>, %61, %cst_24 [0] : vector<8x16xi32> to vector<16xi32>
    %63 = vector.shape_cast %62 : vector<16xi32> to vector<1x16xi32>
    %64 = vector.broadcast %24 : vector<8x1xi32> to vector<8x16xi32>
    %65 = vector.broadcast %63 : vector<1x16xi32> to vector<8x16xi32>
    %66 = arith.cmpi eq, %64, %65 : vector<8x16xi32>
    %67 = arith.extui %66 : vector<8x16xi1> to vector<8x16xi32>
    %68 = arith.sitofp %67 : vector<8x16xi32> to vector<8x16xf32>
    %69 = math.sqrt %55 : vector<1x16xf32>
    %cst_25 = arith.constant 9.99999974E-6 : f32
    %70 = vector.broadcast %cst_25 : f32 to vector<1x16xf32>
    %71 = arith.addf %69, %70 : vector<1x16xf32>
    %cst_26 = arith.constant 1.000000e+00 : f32
    %72 = vector.broadcast %cst_26 : f32 to vector<1x16xf32>
    %73 = arith.divf %72, %71 : vector<1x16xf32>
    %74 = vector.broadcast %73 : vector<1x16xf32> to vector<8x16xf32>
    %75 = arith.mulf %68, %74 : vector<8x16xf32>
    %76 = arith.addf %49, %75 : vector<8x16xf32>
    %77 = arith.addf %50, %73 : vector<1x16xf32>
    %cst_27 = arith.constant 1.000000e+30 : f32
    %78 = vector.broadcast %cst_27 : f32 to vector<8x16xf32>
    %79 = arith.mulf %68, %78 : vector<8x16xf32>
    %80 = arith.addf %53, %79 : vector<8x16xf32>
    %cst_28 = arith.constant dense<0x7F800000> : vector<16xf32>
    %81 = vector.multi_reduction <minimumf>, %80, %cst_28 [0] : vector<8x16xf32> to vector<16xf32>
    %82 = vector.shape_cast %81 : vector<16xf32> to vector<1x16xf32>
    %83 = vector.broadcast %82 : vector<1x16xf32> to vector<8x16xf32>
    %84 = arith.cmpf oeq, %80, %83 : vector<8x16xf32>
    %c8_i32_29 = arith.constant 8 : i32
    %85 = vector.shape_cast %24 : vector<8x1xi32> to vector<8x1xi32>
    %86 = vector.broadcast %85 : vector<8x1xi32> to vector<8x16xi32>
    %87 = vector.broadcast %c8_i32_29 : i32 to vector<8x16xi32>
    %88 = arith.select %84, %86, %87 : vector<8x16xi1>, vector<8x16xi32>
    %cst_30 = arith.constant dense<2147483647> : vector<16xi32>
    %89 = vector.multi_reduction <minsi>, %88, %cst_30 [0] : vector<8x16xi32> to vector<16xi32>
    %90 = vector.shape_cast %89 : vector<16xi32> to vector<1x16xi32>
    %91 = vector.broadcast %24 : vector<8x1xi32> to vector<8x16xi32>
    %92 = vector.broadcast %90 : vector<1x16xi32> to vector<8x16xi32>
    %93 = arith.cmpi eq, %91, %92 : vector<8x16xi32>
    %94 = arith.extui %93 : vector<8x16xi1> to vector<8x16xi32>
    %95 = arith.sitofp %94 : vector<8x16xi32> to vector<8x16xf32>
    %96 = math.sqrt %82 : vector<1x16xf32>
    %cst_31 = arith.constant 9.99999974E-6 : f32
    %97 = vector.broadcast %cst_31 : f32 to vector<1x16xf32>
    %98 = arith.addf %96, %97 : vector<1x16xf32>
    %cst_32 = arith.constant 1.000000e+00 : f32
    %99 = vector.broadcast %cst_32 : f32 to vector<1x16xf32>
    %100 = arith.divf %99, %98 : vector<1x16xf32>
    %101 = vector.broadcast %100 : vector<1x16xf32> to vector<8x16xf32>
    %102 = arith.mulf %95, %101 : vector<8x16xf32>
    %103 = arith.addf %76, %102 : vector<8x16xf32>
    %104 = arith.addf %77, %100 : vector<1x16xf32>
    %cst_33 = arith.constant 1.000000e+00 : f32
    %105 = vector.broadcast %cst_33 : f32 to vector<1x16xf32>
    %106 = arith.divf %105, %104 : vector<1x16xf32>
    %107 = vector.broadcast %106 : vector<1x16xf32> to vector<8x16xf32>
    %108 = arith.mulf %103, %107 : vector<8x16xf32>
    %cst_34 = arith.constant dense<0.000000e+00> : vector<16x16xf32>
    %109 = tpu.matmul %6, %108, %cst_34 {dimension_numbers = #tpu.dot_dimension_numbers<[1], [0], [0], [1], [0, 0, 1, 1], [], []>} : vector<16x8xf32>, vector<8x16xf32>, vector<16x16xf32> -> vector<16x16xf32>
    %c0_35 = arith.constant 0 : index
    %c0_36 = arith.constant 0 : index
    %110 = vector.load %arg6[%c0_35, %c0_36] : memref<32x8xf32, #tpu.memory_space<vmem>>, vector<32x8xf32>
    %cst_37 = arith.constant dense<0.000000e+00> : vector<32x16xf32>
    %111 = tpu.matmul %110, %8, %cst_37 {dimension_numbers = #tpu.dot_dimension_numbers<[1], [0], [0], [1], [0, 0, 1, 1], [], []>} : vector<32x8xf32>, vector<8x16xf32>, vector<32x16xf32> -> vector<32x16xf32>
    %c0_38 = arith.constant 0 : index
    %c0_39 = arith.constant 0 : index
    %112 = vector.load %arg7[%c0_38, %c0_39] : memref<32x16xf32, #tpu.memory_space<vmem>>, vector<32x16xf32>
    %cst_40 = arith.constant dense<0.000000e+00> : vector<32x16xf32>
    %113 = tpu.matmul %112, %109, %cst_40 {dimension_numbers = #tpu.dot_dimension_numbers<[1], [0], [0], [1], [0, 0, 1, 1], [], []>} : vector<32x16xf32>, vector<16x16xf32>, vector<32x16xf32> -> vector<32x16xf32>
    %114 = arith.addf %111, %113 : vector<32x16xf32>
    %c0_41 = arith.constant 0 : index
    %c0_42 = arith.constant 0 : index
    %c0_43 = arith.constant 0 : index
    %115 = vector.load %arg8[%c0_41, %c0_42, %c0_43] : memref<1x32x16xf32, #tpu.memory_space<vmem>>, vector<1x32x16xf32>
    %116 = vector.shape_cast %115 : vector<1x32x16xf32> to vector<32x16xf32>
    %117 = vector.shape_cast %114 : vector<32x16xf32> to vector<1x32x16xf32>
    tpu.vector_store %arg8[%c0_41, %c0_42, %c0_43], %117 {strides = array<i32>} : memref<1x32x16xf32, #tpu.memory_space<vmem>>, vector<1x32x16xf32>,
    %cst_44 = arith.constant dense<0.000000e+00> : vector<32xf32>
    %118 = vector.multi_reduction <add>, %114, %cst_44 [1] : vector<32x16xf32> to vector<32xf32>
    %119 = vector.shape_cast %118 : vector<32xf32> to vector<32x1xf32>
    %120 = arith.mulf %114, %114 : vector<32x16xf32>
    %cst_45 = arith.constant dense<0.000000e+00> : vector<32xf32>
    %121 = vector.multi_reduction <add>, %120, %cst_45 [1] : vector<32x16xf32> to vector<32xf32>
    %122 = vector.shape_cast %121 : vector<32xf32> to vector<32x1xf32>
    %123 = tpu.concatenate %119, %122 in 1 : vector<32x1xf32>, vector<32x1xf32> -> vector<32x2xf32>
    %c0_46 = arith.constant 0 : index
    %c0_47 = arith.constant 0 : index
    %c0_48 = arith.constant 0 : index
    %c0_49 = arith.constant 0 : index
    %124 = vector.load %arg9[%c0_46, %c0_47, %c0_48, %c0_49] : memref<1x1x32x2xf32, #tpu.memory_space<vmem>>, vector<1x1x32x2xf32>
    %125 = vector.shape_cast %124 : vector<1x1x32x2xf32> to vector<32x2xf32>
    %126 = vector.shape_cast %123 : vector<32x2xf32> to vector<1x1x32x2xf32>
    tpu.vector_store %arg9[%c0_46, %c0_47, %c0_48, %c0_49], %126 {strides = array<i32>} : memref<1x1x32x2xf32, #tpu.memory_space<vmem>>, vector<1x1x32x2xf32>,
    return
  }
  func.func @transform_0(%arg0: i32, %arg1: i32) -> (i32, i32, i32) {
    %c0_i32 = arith.constant 0 : i32
    %c0_i32_0 = arith.constant 0 : i32
    return %arg0, %c0_i32, %arg1 : i32, i32, i32
  }
  func.func @transform_1(%arg0: i32, %arg1: i32) -> (i32, i32, i32) {
    %c0_i32 = arith.constant 0 : i32
    %c0_i32_0 = arith.constant 0 : i32
    return %arg0, %c0_i32, %arg1 : i32, i32, i32
  }
  func.func @transform_2(%arg0: i32, %arg1: i32) -> (i32, i32, i32) {
    %c0_i32 = arith.constant 0 : i32
    %c0_i32_0 = arith.constant 0 : i32
    %c0_i32_1 = arith.constant 0 : i32
    return %arg0, %c0_i32, %c0_i32_0 : i32, i32, i32
  }
  func.func @transform_3(%arg0: i32, %arg1: i32) -> (i32, i32, i32) {
    %c0_i32 = arith.constant 0 : i32
    %c0_i32_0 = arith.constant 0 : i32
    %c0_i32_1 = arith.constant 0 : i32
    return %arg0, %c0_i32, %c0_i32_0 : i32, i32, i32
  }
  func.func @transform_4(%arg0: i32, %arg1: i32) -> (i32, i32) {
    %c0_i32 = arith.constant 0 : i32
    %c0_i32_0 = arith.constant 0 : i32
    %c0_i32_1 = arith.constant 0 : i32
    return %c0_i32, %c0_i32_0 : i32, i32
  }
  func.func @transform_5(%arg0: i32, %arg1: i32) -> (i32, i32) {
    %c0_i32 = arith.constant 0 : i32
    %c0_i32_0 = arith.constant 0 : i32
    %c0_i32_1 = arith.constant 0 : i32
    return %c0_i32, %c0_i32_0 : i32, i32
  }
  func.func @transform_6(%arg0: i32, %arg1: i32) -> (i32, i32, i32) {
    %c0_i32 = arith.constant 0 : i32
    %c0_i32_0 = arith.constant 0 : i32
    return %arg0, %c0_i32, %arg1 : i32, i32, i32
  }
  func.func @transform_7(%arg0: i32, %arg1: i32) -> (i32, i32, i32, i32) {
    %c0_i32 = arith.constant 0 : i32
    %c0_i32_0 = arith.constant 0 : i32
    %c0_i32_1 = arith.constant 0 : i32
    return %arg0, %arg1, %c0_i32, %c0_i32_0 : i32, i32, i32, i32
  }
}

</mosaic_0001>

<llo_original>
// kernel: tpu_custom_call.1
$region0: #{tpu_custom_call.1}
  #allocation0 [shape = 'u32[]', space=smem, size = 0x4, offset = 0x4, fixed_abs, tag = 'smem constant byte address 0x4 - core index']
  #allocation1 [shape = 'u32[144,128]{1,0:T(1,128)}', space=vmem, size = 0x12000, scoped, tag = 'internal scratch']
  %s0 = inlined_call_operand.vmem [shape: f32[2,3,16], index: 0, kind: input, shape index: {}]
  %s1 = inlined_call_operand.vmem [shape: f32[2,8,16], index: 1, kind: input, shape index: {}]
  %s2 = inlined_call_operand.vmem [shape: f32[2,3,8], index: 2, kind: input, shape index: {}]
  %s3 = inlined_call_operand.vmem [shape: f32[2,16,8], index: 3, kind: input, shape index: {}]
  %s4 = inlined_call_operand.vmem [shape: f32[32,8], index: 4, kind: input, shape index: {}]
  %s5 = inlined_call_operand.vmem [shape: f32[32,16], index: 5, kind: input, shape index: {}]
  %s6 = inlined_call_operand.vmem [shape: f32[2,32,16], index: 6, kind: output, shape index: {0}]
  %s7 = inlined_call_operand.vmem [shape: f32[2,1,32,2], index: 7, kind: output, shape index: {1}]
  %8 = xla_tuple %s6, %s7
  %s9 = sld [smem:[#allocation0]]
  $region65: #{tpu_custom_call.1} parent=0
    _
  %s11 = ssub.s32 1, %s9
  %s12 = scalar_select 0, %s11, %s9
  loop: start=0, step=1, limit=4
  $region2: #{tpu_custom_call.1} parent=0 // loop_pre_header
    _
  $region3: #{tpu_custom_call.1} parent=0 // loop_header
    %s14 = sphi 0, %s18
    %p15 = scmp.ge.s32.totalorder %s14, 4
    %s21 = sphi 0, %s33
    %s22 = sphi 0, %s29
    %s23 = sphi 0, %s21
    %s24 = sphi 0, %s22
    %s25 = sphi 0, %s23
    %s26 = sphi 0, %s24
    %s38 = sphi 0, %s40
    %s41 = sphi 0, %s38
    %s42 = sphi 0, %s41
    %s58 = sphi 0, %s42
    %s66 = sphi 0, %s68
    %s69 = sphi 0, %s66
    %s70 = sphi 0, %s69
    %s86 = sphi 0, %s70
    %s92 = sphi 0, %s94
    %s95 = sphi 0, %s92
    %s96 = sphi 0, %s95
    %s112 = sphi 0, %s96
    %s118 = sphi 0, %s120
    %s121 = sphi 0, %s118
    %s122 = sphi 0, %s121
    %s138 = sphi 0, %s122
    %s142 = sphi 0, %s142
    %s144 = sphi 0, %s142
    %s145 = sphi 0, %s144
    %s159 = sphi 0, %s145
    %s163 = sphi 0, %s163
    %s165 = sphi 0, %s163
    %s166 = sphi 0, %s165
    %s180 = sphi 0, %s166
    %s188 = sphi 0, %s190
    %s191 = sphi 0, %s188
    %s192 = sphi 0, %s191
    %s208 = sphi 0, %s192
    %s216 = sphi 0, %s218
    %s219 = sphi 0, %s216
    %s220 = sphi 0, %s219
    %s236 = sphi 0, %s220
  $region4: #{tpu_custom_call.1} parent=0 // loop_header_branch
    %17 = sbr.rel (%p15) target = $region8
  $region5: #{tpu_custom_call.1} parent=0 // loop_body
    %s19 = ssub.s32 %s14, 1
    %s20 = ssub.s32 %s14, 2
    %s27 = sadd.s32 1, %s22
    %p28 = scmp.ge.s32.totalorder %s27, 1
    %s29 = scalar_select %p28, 0, %s27
    %s30 = sadd.s32 1, %s21
    %s31 = scalar_select %p28, %s30, %s21
    %p32 = scmp.ge.s32.totalorder %s31, 2
    %s33 = scalar_select %p32, 0, %s31
    %s34 = ssub.s32 %s21, %s33
    %s35 = ssub.s32 %s22, %s29
    %s36 = sor.u32 %s34, %s35
    %p37 = scmp.eq.s32.totalorder %s36, 0
    %s39 = sadd.s32 %s38, 1
    %s40 = scalar_select %p37, %s38, %s39
    %p43 = pneg %p37
    %p44 = scmp.eq.s32.totalorder %s14, 1
    %p45 = por %p43, %p44
    %p46 = scmp.ne.s32.totalorder %s38, %s41
    %p47 = scmp.eq.s32.totalorder %s14, 0
    %p48 = por %p46, %p47
    %p49 = scmp.ne.s32.totalorder %s38, %s41
    %p50 = scmp.eq.s32.totalorder %s19, 1
    %p51 = por %p49, %p50
    %p52 = scmp.ne.s32.totalorder %s41, %s42
    %p53 = scmp.eq.s32.totalorder %s19, 0
    %p54 = por %p52, %p53
    %p55 = scmp.ne.s32.totalorder %s41, %s42
    %p56 = scmp.eq.s32.totalorder %s20, 1
    %p57 = por %p55, %p56
    %p59 = scmp.ne.s32.totalorder %s42, %s58
    %p60 = scmp.eq.s32.totalorder %s20, 0
    %p61 = por %p59, %p60
    %s62 = ssub.s32 %s21, %s33
    %s63 = ssub.s32 %s22, %s29
    %s64 = sor.u32 %s62, %s63
    %p65 = scmp.eq.s32.totalorder %s64, 0
    %s67 = sadd.s32 %s66, 1
    %s68 = scalar_select %p65, %s66, %s67
    %p71 = pneg %p65
    %p72 = scmp.eq.s32.totalorder %s14, 1
    %p73 = por %p71, %p72
    %p74 = scmp.ne.s32.totalorder %s66, %s69
    %p75 = scmp.eq.s32.totalorder %s14, 0
    %p76 = por %p74, %p75
    %p77 = scmp.ne.s32.totalorder %s66, %s69
    %p78 = scmp.eq.s32.totalorder %s19, 1
    %p79 = por %p77, %p78
    %p80 = scmp.ne.s32.totalorder %s69, %s70
    %p81 = scmp.eq.s32.totalorder %s19, 0
    %p82 = por %p80, %p81
    %p83 = scmp.ne.s32.totalorder %s69, %s70
    %p84 = scmp.eq.s32.totalorder %s20, 1
    %p85 = por %p83, %p84
    %p87 = scmp.ne.s32.totalorder %s70, %s86
    %p88 = scmp.eq.s32.totalorder %s20, 0
    %p89 = por %p87, %p88
    %s90 = ssub.s32 %s21, %s33
    %p91 = scmp.eq.s32.totalorder %s90, 0
    %s93 = sadd.s32 %s92, 1
    %s94 = scalar_select %p91, %s92, %s93
    %p97 = pneg %p91
    %p98 = scmp.eq.s32.totalorder %s14, 1
    %p99 = por %p97, %p98
    %p100 = scmp.ne.s32.totalorder %s92, %s95
    %p101 = scmp.eq.s32.totalorder %s14, 0
    %p102 = por %p100, %p101
    %p103 = scmp.ne.s32.totalorder %s92, %s95
    %p104 = scmp.eq.s32.totalorder %s19, 1
    %p105 = por %p103, %p104
    %p106 = scmp.ne.s32.totalorder %s95, %s96
    %p107 = scmp.eq.s32.totalorder %s19, 0
    %p108 = por %p106, %p107
    %p109 = scmp.ne.s32.totalorder %s95, %s96
    %p110 = scmp.eq.s32.totalorder %s20, 1
    %p111 = por %p109, %p110
    %p113 = scmp.ne.s32.totalorder %s96, %s112
    %p114 = scmp.eq.s32.totalorder %s20, 0
    %p115 = por %p113, %p114
    %s116 = ssub.s32 %s21, %s33
    %p117 = scmp.eq.s32.totalorder %s116, 0
    %s119 = sadd.s32 %s118, 1
    %s120 = scalar_select %p117, %s118, %s119
    %p123 = pneg %p117
    %p124 = scmp.eq.s32.totalorder %s14, 1
    %p125 = por %p123, %p124
    %p126 = scmp.ne.s32.totalorder %s118, %s121
    %p127 = scmp.eq.s32.totalorder %s14, 0
    %p128 = por %p126, %p127
    %p129 = scmp.ne.s32.totalorder %s118, %s121
    %p130 = scmp.eq.s32.totalorder %s19, 1
    %p131 = por %p129, %p130
    %p132 = scmp.ne.s32.totalorder %s121, %s122
    %p133 = scmp.eq.s32.totalorder %s19, 0
    %p134 = por %p132, %p133
    %p135 = scmp.ne.s32.totalorder %s121, %s122
    %p136 = scmp.eq.s32.totalorder %s20, 1
    %p137 = por %p135, %p136
    %p139 = scmp.ne.s32.totalorder %s122, %s138
    %p140 = scmp.eq.s32.totalorder %s20, 0
    %p141 = por %p139, %p140
    %s143 = sadd.s32 %s142, 1
    %p146 = scmp.eq.s32.totalorder %s14, 1
    %p147 = scmp.ne.s32.totalorder %s142, %s144
    %p148 = scmp.eq.s32.totalorder %s14, 0
    %p149 = por %p147, %p148
    %p150 = scmp.ne.s32.totalorder %s142, %s144
    %p151 = scmp.eq.s32.totalorder %s19, 1
    %p152 = por %p150, %p151
    %p153 = scmp.ne.s32.totalorder %s144, %s145
    %p154 = scmp.eq.s32.totalorder %s19, 0
    %p155 = por %p153, %p154
    %p156 = scmp.ne.s32.totalorder %s144, %s145
    %p157 = scmp.eq.s32.totalorder %s20, 1
    %p158 = por %p156, %p157
    %p160 = scmp.ne.s32.totalorder %s145, %s159
    %p161 = scmp.eq.s32.totalorder %s20, 0
    %p162 = por %p160, %p161
    %s164 = sadd.s32 %s163, 1
    %p167 = scmp.eq.s32.totalorder %s14, 1
    %p168 = scmp.ne.s32.totalorder %s163, %s165
    %p169 = scmp.eq.s32.totalorder %s14, 0
    %p170 = por %p168, %p169
    %p171 = scmp.ne.s32.totalorder %s163, %s165
    %p172 = scmp.eq.s32.totalorder %s19, 1
    %p173 = por %p171, %p172
    %p174 = scmp.ne.s32.totalorder %s165, %s166
    %p175 = scmp.eq.s32.totalorder %s19, 0
    %p176 = por %p174, %p175
    %p177 = scmp.ne.s32.totalorder %s165, %s166
    %p178 = scmp.eq.s32.totalorder %s20, 1
    %p179 = por %p177, %p178
    %p181 = scmp.ne.s32.totalorder %s166, %s180
    %p182 = scmp.eq.s32.totalorder %s20, 0
    %p183 = por %p181, %p182
    %s184 = ssub.s32 %s21, %s33
    %s185 = ssub.s32 %s22, %s29
    %s186 = sor.u32 %s184, %s185
    %p187 = scmp.eq.s32.totalorder %s186, 0
    %s189 = sadd.s32 %s188, 1
    %s190 = scalar_select %p187, %s188, %s189
    %p193 = pneg %p187
    %p194 = scmp.eq.s32.totalorder %s14, 1
    %p195 = por %p193, %p194
    %p196 = scmp.ne.s32.totalorder %s188, %s191
    %p197 = scmp.eq.s32.totalorder %s14, 0
    %p198 = por %p196, %p197
    %p199 = scmp.ne.s32.totalorder %s188, %s191
    %p200 = scmp.eq.s32.totalorder %s19, 1
    %p201 = por %p199, %p200
    %p202 = scmp.ne.s32.totalorder %s191, %s192
    %p203 = scmp.eq.s32.totalorder %s19, 0
    %p204 = por %p202, %p203
    %p205 = scmp.ne.s32.totalorder %s191, %s192
    %p206 = scmp.eq.s32.totalorder %s20, 1
    %p207 = por %p205, %p206
    %p209 = scmp.ne.s32.totalorder %s192, %s208
    %p210 = scmp.eq.s32.totalorder %s20, 0
    %p211 = por %p209, %p210
    %s212 = ssub.s32 %s21, %s33
    %s213 = ssub.s32 %s22, %s29
    %s214 = sor.u32 %s212, %s213
    %p215 = scmp.eq.s32.totalorder %s214, 0
    %s217 = sadd.s32 %s216, 1
    %s218 = scalar_select %p215, %s216, %s217
    %p221 = pneg %p215
    %p222 = scmp.eq.s32.totalorder %s14, 1
    %p223 = por %p221, %p222
    %p224 = scmp.ne.s32.totalorder %s216, %s219
    %p225 = scmp.eq.s32.totalorder %s14, 0
    %p226 = por %p224, %p225
    %p227 = scmp.ne.s32.totalorder %s216, %s219
    %p228 = scmp.eq.s32.totalorder %s19, 1
    %p229 = por %p227, %p228
    %p230 = scmp.ne.s32.totalorder %s219, %s220
    %p231 = scmp.eq.s32.totalorder %s19, 0
    %p232 = por %p230, %p231
    %p233 = scmp.ne.s32.totalorder %s219, %s220
    %p234 = scmp.eq.s32.totalorder %s20, 1
    %p235 = por %p233, %p234
    %p237 = scmp.ne.s32.totalorder %s220, %s236
    %p238 = scmp.eq.s32.totalorder %s20, 0
    %p239 = por %p237, %p238
    %p240 = scmp.le.s32.totalorder 1, %s14
    %p241 = scmp.lt.s32.totalorder %s14, 3
    %p242 = pnand %p240, %p241
    %p243 = pneg %p242
    // Predicated region
    $region9: #{tpu_custom_call.1} parent=5 // pred_check
      _
    $region10: #{tpu_custom_call.1} parent=5 // pred_check_branch
      %245 = sbr.rel (%p242) target = $region12
    $region11: #{tpu_custom_call.1} parent=5 // pred_region
      %s246 = ssub.s32 %s14, 1
      // Predicated region
      $region13: #{tpu_custom_call.1} parent=11 // pred_check
        %p247 = pneg %p155
      $region14: #{tpu_custom_call.1} parent=11 // pred_check_branch
        %249 = sbr.rel (%p247) target = $region16
      $region15: #{tpu_custom_call.1} parent=11 // pred_region
        _
      $region16: #{tpu_custom_call.1} parent=11 // pred_fallthru
        _
      // Predicated region
      $region17: #{tpu_custom_call.1} parent=11 // pred_check
        %p250 = pneg %p176
      $region18: #{tpu_custom_call.1} parent=11 // pred_check_branch
        %252 = sbr.rel (%p250) target = $region20
      $region19: #{tpu_custom_call.1} parent=11 // pred_region
        _
      $region20: #{tpu_custom_call.1} parent=11 // pred_fallthru
        _
    $region12: #{tpu_custom_call.1} parent=5 // pred_fallthru
      _
    %p253 = scmp.lt.s32.totalorder %s14, 2
    // Predicated region
    $region21: #{tpu_custom_call.1} parent=5 // pred_check
      %p254 = pneg %p253
    $region22: #{tpu_custom_call.1} parent=5 // pred_check_branch
      %256 = sbr.rel (%p254) target = $region24
    $region23: #{tpu_custom_call.1} parent=5 // pred_region
      // Predicated region
      $region25: #{tpu_custom_call.1} parent=23 // pred_check
        %p257 = pneg %p48
      $region26: #{tpu_custom_call.1} parent=23 // pred_check_branch
        %259 = sbr.rel (%p257) target = $region28
      $region27: #{tpu_custom_call.1} parent=23 // pred_region
        %p260 = scmp.lt.s32.totalorder %s21, 1
        %s261 = scalar_select %p260, %s21, 1
        %p262 = scmp.lt.s32.totalorder %s22, 0
        %s263 = scalar_select %p262, %s22, 0
        %s264 = sadd.s32 %s263, %s261
        %s265 = smul.addr %s264, 4
        %s266 = scalar_lea.vmem %s0, %s265
      $region28: #{tpu_custom_call.1} parent=23 // pred_fallthru
        _
      // Predicated region
      $region29: #{tpu_custom_call.1} parent=23 // pred_check
        %p267 = pneg %p76
      $region30: #{tpu_custom_call.1} parent=23 // pred_check_branch
        %269 = sbr.rel (%p267) target = $region32
      $region31: #{tpu_custom_call.1} parent=23 // pred_region
        %p270 = scmp.lt.s32.totalorder %s21, 1
        %s271 = scalar_select %p270, %s21, 1
        %p272 = scmp.lt.s32.totalorder %s22, 0
        %s273 = scalar_select %p272, %s22, 0
        %s274 = sadd.s32 %s273, %s271
        %s275 = smul.addr %s274, 8
        %s276 = scalar_lea.vmem %s1, %s275
      $region32: #{tpu_custom_call.1} parent=23 // pred_fallthru
        _
      // Predicated region
      $region33: #{tpu_custom_call.1} parent=23 // pred_check
        %p277 = pneg %p102
      $region34: #{tpu_custom_call.1} parent=23 // pred_check_branch
        %279 = sbr.rel (%p277) target = $region36
      $region35: #{tpu_custom_call.1} parent=23 // pred_region
        %p280 = scmp.lt.s32.totalorder %s21, 1
        %s281 = scalar_select %p280, %s21, 1
        %s282 = smul.addr %s281, 4
        %s283 = scalar_lea.vmem %s2, %s282
      $region36: #{tpu_custom_call.1} parent=23 // pred_fallthru
        _
      // Predicated region
      $region37: #{tpu_custom_call.1} parent=23 // pred_check
        %p284 = pneg %p128
      $region38: #{tpu_custom_call.1} parent=23 // pred_check_branch
        %286 = sbr.rel (%p284) target = $region40
      $region39: #{tpu_custom_call.1} parent=23 // pred_region
        %p287 = scmp.lt.s32.totalorder %s21, 1
        %s288 = scalar_select %p287, %s21, 1
        %s289 = smul.addr %s288, 2
        %s290 = smul.addr %s289, 8
        %s291 = scalar_lea.vmem %s3, %s290
      $region40: #{tpu_custom_call.1} parent=23 // pred_fallthru
        _
    $region24: #{tpu_custom_call.1} parent=5 // pred_fallthru
      _
    %p292 = scmp.le.s32.totalorder 1, %s14
    %p293 = scmp.lt.s32.totalorder %s14, 3
    %p294 = pnand %p292, %p293
    %p295 = pneg %p294
    // Predicated region
    $region41: #{tpu_custom_call.1} parent=5 // pred_check
      _
    $region42: #{tpu_custom_call.1} parent=5 // pred_check_branch
      %297 = sbr.rel (%p294) target = $region44
    $region43: #{tpu_custom_call.1} parent=5 // pred_region
      %s298 = ssub.s32 %s14, 1
      %p299 = scmp.lt.s32.totalorder %s23, 1
      %s300 = scalar_select %p299, %s23, 1
      %p301 = scmp.lt.s32.totalorder %s24, 0
      %s302 = scalar_select %p301, %s24, 0
      %s303 = sadd.s32 %s302, %s300
      %s304 = smul.addr %s303, 4
      %s305 = scalar_lea.vmem %s0, %s304
      %p306 = pneg %p54
      %p307 = pneg %p51
      %p308 = scmp.lt.s32.totalorder %s23, 1
      %s309 = scalar_select %p308, %s23, 1
      %p310 = scmp.lt.s32.totalorder %s24, 0
      %s311 = scalar_select %p310, %s24, 0
      %s312 = sadd.s32 %s311, %s309
      %s313 = smul.addr %s312, 8
      %s314 = scalar_lea.vmem %s1, %s313
      %p315 = pneg %p82
      %p316 = pneg %p79
      %p317 = scmp.lt.s32.totalorder %s23, 1
      %s318 = scalar_select %p317, %s23, 1
      %s319 = smul.addr %s318, 4
      %s320 = scalar_lea.vmem %s2, %s319
      %p321 = pneg %p108
      %p322 = pneg %p105
      %p323 = scmp.lt.s32.totalorder %s23, 1
      %s324 = scalar_select %p323, %s23, 1
      %s325 = smul.addr %s324, 2
      %s326 = smul.addr %s325, 8
      %s327 = scalar_lea.vmem %s3, %s326
      %p328 = pneg %p134
      %p329 = pneg %p131
      %p330 = pneg %p155
      %p331 = pneg %p152
      %p332 = pneg %p176
      %p333 = pneg %p173
      %p334 = pneg %p204
      %p335 = pneg %p201
      %p336 = scmp.lt.s32.totalorder %s23, 1
      %s337 = scalar_select %p336, %s23, 1
      %p338 = scmp.lt.s32.totalorder %s24, 0
      %s339 = scalar_select %p338, %s24, 0
      %s340 = smul.addr %s337, 4
      %s341 = sadd.s32 %s339, %s340
      %s342 = smul.addr %s341, 8
      %s343 = scalar_lea.vmem %s6, %s342
      %p344 = pneg %p232
      %p345 = pneg %p229
      %p346 = scmp.lt.s32.totalorder %s23, 1
      %s347 = scalar_select %p346, %s23, 1
      %p348 = scmp.lt.s32.totalorder %s24, 0
      %s349 = scalar_select %p348, %s24, 0
      %s350 = smul.addr %s349, 4
      %s351 = smul.addr %s347, 4
      %s352 = sadd.s32 %s350, %s351
      %s353 = smul.addr %s352, 8
      %s354 = scalar_lea.vmem %s7, %s353
      %p355 = scmp.lt.s32.totalorder %s23, 1
      %s356 = scalar_select %p355, %s23, 1
      %p357 = scmp.lt.s32.totalorder %s24, 0
      %s358 = scalar_select %p357, %s24, 0
      %s359 = sadd.s32 %s358, %s356
      %s360 = smul.addr %s359, 4
      %s361 = scalar_lea.vmem %s0, %s360
      %p362 = scmp.lt.s32.totalorder %s23, 1
      %s363 = scalar_select %p362, %s23, 1
      %p364 = scmp.lt.s32.totalorder %s24, 0
      %s365 = scalar_select %p364, %s24, 0
      %s366 = sadd.s32 %s365, %s363
      %s367 = smul.addr %s366, 8
      %s368 = scalar_lea.vmem %s1, %s367
      %p369 = scmp.lt.s32.totalorder %s23, 1
      %s370 = scalar_select %p369, %s23, 1
      %s371 = smul.addr %s370, 4
      %s372 = scalar_lea.vmem %s2, %s371
      %p373 = scmp.lt.s32.totalorder %s23, 1
      %s374 = scalar_select %p373, %s23, 1
      %s375 = smul.addr %s374, 2
      %s376 = smul.addr %s375, 8
      %s377 = scalar_lea.vmem %s3, %s376
      %p378 = scmp.lt.s32.totalorder %s23, 1
      %s379 = scalar_select %p378, %s23, 1
      %p380 = scmp.lt.s32.totalorder %s24, 0
      %s381 = scalar_select %p380, %s24, 0
      %s382 = smul.addr %s379, 4
      %s383 = sadd.s32 %s381, %s382
      %s384 = smul.addr %s383, 8
      %s385 = scalar_lea.vmem %s6, %s384
      %p386 = scmp.lt.s32.totalorder %s23, 1
      %s387 = scalar_select %p386, %s23, 1
      %p388 = scmp.lt.s32.totalorder %s24, 0
      %s389 = scalar_select %p388, %s24, 0
      %s390 = smul.addr %s389, 4
      %s391 = smul.addr %s387, 4
      %s392 = sadd.s32 %s390, %s391
      %s393 = smul.addr %s392, 8
      %s394 = scalar_lea.vmem %s7, %s393
      %v395 = vld [vmem:[%s361] sm:$0x7]
      %v396 = vld [vmem:[%s372] sm:$0x7]
      %397 = vxpose.xlu0.b32.start [1/16] %v396, 128
      %398 = vxpose.xlu0.b32.cont [2/16] 0.0, 128
      %399 = vxpose.xlu0.b32.cont [3/16] 0.0, 128
      %400 = vxpose.xlu0.b32.cont [4/16] 0.0, 128
      %401 = vxpose.xlu0.b32.cont [5/16] 0.0, 128
      %402 = vxpose.xlu0.b32.cont [6/16] 0.0, 128
      %403 = vxpose.xlu0.b32.cont [7/16] 0.0, 128
      %404 = vxpose.xlu0.b32.cont [8/16] 0.0, 128
      %405 = vxpose.xlu0.b32.cont [9/16] 0.0, 128
      %406 = vxpose.xlu0.b32.cont [10/16] 0.0, 128
      %407 = vxpose.xlu0.b32.cont [11/16] 0.0, 128
      %408 = vxpose.xlu0.b32.cont [12/16] 0.0, 128
      %409 = vxpose.xlu0.b32.cont [13/16] 0.0, 128
      %410 = vxpose.xlu0.b32.cont [14/16] 0.0, 128
      %411 = vxpose.xlu0.b32.cont [15/16] 0.0, 128
      %412 = vxpose.xlu0.b32.end [16/16] 0.0, 128
      %v413 = vpop.trf.xlu0
      %v414 = vpop.trf.xlu0
      %v415 = vpop.trf.xlu0
      %v416 = vpop.trf.xlu0
      %v417 = vpop.trf.xlu0
      %v418 = vpop.trf.xlu0
      %v419 = vpop.trf.xlu0
      %v420 = vpop.trf.xlu0
      %v421 = vpop.trf.xlu0
      %v422 = vpop.trf.xlu0
      %v423 = vpop.trf.xlu0
      %v424 = vpop.trf.xlu0
      %v425 = vpop.trf.xlu0
      %v426 = vpop.trf.xlu0
      %v427 = vpop.trf.xlu0
      %v428 = vpop.trf.xlu0
      %v429 = vld [vmem:[%s377] sm:$0xff]
      %v430 = vld [vmem:[%s377 + $0x8] sm:$0xff]
      %v431 = vld [vmem:[%s368] sm:$0xff]
      %vm432 = vcmask 23552
      %v434 = vsel %vm432, %v413, 0
      %vm436 = vcmask 1042432
      %v438 = vsel %vm436, %v395, 0
      %440 = vmatprep.subr.mxu0 0.0
      %441 = vmatpush1.msra.mxu0 0.0
      %442 = vmatprep.subr.mxu0 0.0
      %443 = vmatpush1.msra.mxu0 0.0
      %444 = vmatprep.subr.mxu0 0.0
      %445 = vmatpush1.msra.mxu0 0.0
      %446 = vmatprep.subr.mxu0 0.0
      %447 = vmatpush1.msra.mxu0 0.0
      %448 = vmatprep.subr.mxu0 0.0
      %449 = vmatpush1.msra.mxu0 0.0
      %450 = vmatprep.subr.mxu0 0.0
      %451 = vmatpush1.msra.mxu0 0.0
      %452 = vmatprep.subr.mxu0 0.0
      %453 = vmatpush1.msra.mxu0 0.0
      %454 = vmatprep.subr.mxu0 0.0
      %455 = vmatpush1.msra.mxu0 0.0
      %456 = vmatprep.subr.mxu0 0.0
      %457 = vmatpush1.msra.mxu0 0.0
      %458 = vmatprep.subr.mxu0 0.0
      %459 = vmatpush1.msra.mxu0 0.0
      %460 = vmatprep.subr.mxu0 0.0
      %461 = vmatpush1.msra.mxu0 0.0
      %462 = vmatprep.subr.mxu0 0.0
      %463 = vmatpush1.msra.mxu0 0.0
      %464 = vmatprep.subr.mxu0 0.0
      %465 = vmatpush1.msra.mxu0 0.0
      %466 = vmatprep.subr.mxu0 0.0
      %467 = vmatpush1.msra.mxu0 0.0
      %468 = vmatprep.subr.mxu0 0.0
      %469 = vmatpush1.msra.mxu0 0.0
      %470 = vmatprep.subr.mxu0 0.0
      %471 = vmatpush1.msra.mxu0 %v438
      %472 = vmatprep.subr.mxu0 0.0
      %473 = vmatpush2.msra.mxu0 0.0
      %474 = vmatprep.subr.mxu0 0.0
      %475 = vmatpush2.msra.mxu0 0.0
      %476 = vmatprep.subr.mxu0 0.0
      %477 = vmatpush2.msra.mxu0 0.0
      %478 = vmatprep.subr.mxu0 0.0
      %479 = vmatpush2.msra.mxu0 0.0
      %480 = vmatprep.subr.mxu0 0.0
      %481 = vmatpush2.msra.mxu0 0.0
      %482 = vmatprep.subr.mxu0 0.0
      %483 = vmatpush2.msra.mxu0 0.0
      %484 = vmatprep.subr.mxu0 0.0
      %485 = vmatpush2.msra.mxu0 0.0
      %486 = vmatprep.subr.mxu0 0.0
      %487 = vmatpush2.msra.mxu0 0.0
      %488 = vmatprep.subr.mxu0 0.0
      %489 = vmatpush2.msra.mxu0 0.0
      %490 = vmatprep.subr.mxu0 0.0
      %491 = vmatpush2.msra.mxu0 0.0
      %492 = vmatprep.subr.mxu0 0.0
      %493 = vmatpush2.msra.mxu0 0.0
      %494 = vmatprep.subr.mxu0 0.0
      %495 = vmatpush2.msra.mxu0 0.0
      %496 = vmatprep.subr.mxu0 0.0
      %497 = vmatpush2.msra.mxu0 0.0
      %498 = vmatprep.subr.mxu0 0.0
      %499 = vmatpush2.msra.mxu0 0.0
      %500 = vmatprep.subr.mxu0 0.0
      %501 = vmatpush2.msra.mxu0 0.0
      %502 = vmatprep.subr.mxu0 0.0
      %503 = vmatpush2.msra.mxu0 0.0
      %504 = vmatprep.mubr.f32.mxu0 0.0
      %505 = vmatmul.mubr.f32.gmra.mxu0 %v434
      %v506 = vpop.f32.mrf.mxu0
      %v507 = vadd.f32 0.0, %v506
      %v508 = vpop.f32.mrf.mxu0
      %509 = vdwg.mxu0
      %v510 = vmul.f32 %v413, %v413
      %v511 = vsel %vm432, %v510, 0.0
      %512 = vadd.xlane.f32.xlu0 %v511
      %v513 = vpop.xlane.xlu0 %512
      %v514 = vmul.f32 %v395, %v395
      %vm515 = vcmask 124928
      %v516 = vsel %vm515, %v514, 0.0
      %v517 = vrot.slane %v516, 4
      %v518 = vadd.f32 %v516, %v517
      %v519 = vrot.slane %v518, 2
      %v520 = vadd.f32 %v518, %v519
      %v521 = vrot.slane %v520, 1
      %v522 = vadd.f32 %v520, %v521
      %v523 = vadd.f32 %v513, %v522
      %v524 = vmul.f32 %v507, 2.0
      %v525 = vsub.f32 %v523, %v524
      %v526 = vmax.f32 %v525, 0.0
      %v527 = vlaneseq
      %v528 = vshrl.u32 %v527, 7
      %vm529 = vcmask 130048
      %v530 = vsel %vm529, %v526, inf
      %v531 = vrot.slane %v530, 4
      %v532 = vmin.f32 %v530, %v531
      %v533 = vrot.slane %v532, 2
      %v534 = vmin.f32 %v532, %v533
      %v535 = vrot.slane %v534, 1
      %v536 = vmin.f32 %v534, %v535
      %vm537 = vcmp.eq.f32.partialorder %v526, %v536
      %v538 = vsel %vm537, %v528, 8
      %v539 = vsel %vm529, %v538, 2147483647
      %v540 = vrot.slane %v539, 4
      %vm541 = vcmp.lt.s32.totalorder %v539, %v540
      %v542 = vsel %vm541, %v539, %v540
      %v543 = vrot.slane %v542, 2
      %vm544 = vcmp.lt.s32.totalorder %v542, %v543
      %v545 = vsel %vm544, %v542, %v543
      %v546 = vrot.slane %v545, 1
      %vm547 = vcmp.lt.s32.totalorder %v545, %v546
      %v548 = vsel %vm547, %v545, %v546
      %vm549 = vcmp.eq.s32.totalorder %v528, %v548
      %v550 = vsel %vm549, 1, 0
      %v551 = vcvt.s32.f32 %v550
      %v552 = vrsqrt.pop %v536
      %v553 = vmul.f32 %v536, %v552
      %vm554 = vcmp.eq.f32.partialorder %v536, inf
      %v555 = vsel %vm554, %v536, %v553
      %vm556 = vcmp.eq.f32.partialorder %v536, 0.0
      %v557 = vand.u32 %v536, 2147483648
      %v558 = vsel %vm556, %v557, %v555
      %v559 = vadd.f32 %v558, 1e-05
      %v560 = vrcp.pop %v559
      %v561 = vmul.f32 1.0, %v560
      %v562 = vmul.f32 %v551, %v561
      %v563 = vadd.f32 %v562, 0.0
      %v564 = vadd.f32 %v561, 0.0
      %v565 = vmul.f32 %v551, 1e+30
      %v566 = vadd.f32 %v526, %v565
      %v567 = vsel %vm529, %v566, inf
      %v568 = vrot.slane %v567, 4
      %v569 = vmin.f32 %v567, %v568
      %v570 = vrot.slane %v569, 2
      %v571 = vmin.f32 %v569, %v570
      %v572 = vrot.slane %v571, 1
      %v573 = vmin.f32 %v571, %v572
      %vm574 = vcmp.eq.f32.partialorder %v566, %v573
      %v575 = vsel %vm574, %v528, 8
      %v576 = vsel %vm529, %v575, 2147483647
      %v577 = vrot.slane %v576, 4
      %vm578 = vcmp.lt.s32.totalorder %v576, %v577
      %v579 = vsel %vm578, %v576, %v577
      %v580 = vrot.slane %v579, 2
      %vm581 = vcmp.lt.s32.totalorder %v579, %v580
      %v582 = vsel %vm581, %v579, %v580
      %v583 = vrot.slane %v582, 1
      %vm584 = vcmp.lt.s32.totalorder %v582, %v583
      %v585 = vsel %vm584, %v582, %v583
      %vm586 = vcmp.eq.s32.totalorder %v528, %v585
      %v587 = vsel %vm586, 1, 0
      %v588 = vcvt.s32.f32 %v587
      %v589 = vrsqrt.pop %v573
      %v590 = vmul.f32 %v573, %v589
      %vm591 = vcmp.eq.f32.partialorder %v573, inf
      %v592 = vsel %vm591, %v573, %v590
      %vm593 = vcmp.eq.f32.partialorder %v573, 0.0
      %v594 = vand.u32 %v573, 2147483648
      %v595 = vsel %vm593, %v594, %v592
      %v596 = vadd.f32 %v595, 1e-05
      %v597 = vrcp.pop %v596
      %v598 = vmul.f32 1.0, %v597
      %v599 = vmul.f32 %v588, %v598
      %v600 = vadd.f32 %v563, %v599
      %v601 = vadd.f32 %v564, %v598
      %v602 = vmul.f32 %v588, 1e+30
      %v603 = vadd.f32 %v566, %v602
      %v604 = vsel %vm529, %v603, inf
      %v605 = vrot.slane %v604, 4
      %v606 = vmin.f32 %v604, %v605
      %v607 = vrot.slane %v606, 2
      %v608 = vmin.f32 %v606, %v607
      %v609 = vrot.slane %v608, 1
      %v610 = vmin.f32 %v608, %v609
      %vm611 = vcmp.eq.f32.partialorder %v603, %v610
      %v612 = vsel %vm611, %v528, 8
      %v613 = vsel %vm529, %v612, 2147483647
      %v614 = vrot.slane %v613, 4
      %vm615 = vcmp.lt.s32.totalorder %v613, %v614
      %v616 = vsel %vm615, %v613, %v614
      %v617 = vrot.slane %v616, 2
      %vm618 = vcmp.lt.s32.totalorder %v616, %v617
      %v619 = vsel %vm618, %v616, %v617
      %v620 = vrot.slane %v619, 1
      %vm621 = vcmp.lt.s32.totalorder %v619, %v620
      %v622 = vsel %vm621, %v619, %v620
      %vm623 = vcmp.eq.s32.totalorder %v528, %v622
      %v624 = vsel %vm623, 1, 0
      %v625 = vcvt.s32.f32 %v624
      %v626 = vrsqrt.pop %v610
      %v627 = vmul.f32 %v610, %v626
      %vm628 = vcmp.eq.f32.partialorder %v610, inf
      %v629 = vsel %vm628, %v610, %v627
      %vm630 = vcmp.eq.f32.partialorder %v610, 0.0
      %v631 = vand.u32 %v610, 2147483648
      %v632 = vsel %vm630, %v631, %v629
      %v633 = vadd.f32 %v632, 1e-05
      %v634 = vrcp.pop %v633
      %v635 = vmul.f32 1.0, %v634
      %v636 = vmul.f32 %v625, %v635
      %v637 = vadd.f32 %v600, %v636
      %v638 = vadd.f32 %v601, %v635
      %v639 = vrcp.pop %v638
      %v640 = vmul.f32 1.0, %v639
      %v641 = vmul.f32 %v637, %v640
      %vm642 = vcmask 64512
      %v644 = vsel %vm642, %v429, 0
      %v647 = vsel %vm642, %v430, 0
      %649 = vmatprep.subr.mxu0 0.0
      %650 = vmatpush1.msra.mxu0 0.0
      %651 = vmatprep.subr.mxu0 0.0
      %652 = vmatpush1.msra.mxu0 0.0
      %653 = vmatprep.subr.mxu0 0.0
      %654 = vmatpush1.msra.mxu0 0.0
      %655 = vmatprep.subr.mxu0 0.0
      %656 = vmatpush1.msra.mxu0 0.0
      %657 = vmatprep.subr.mxu0 0.0
      %658 = vmatpush1.msra.mxu0 0.0
      %659 = vmatprep.subr.mxu0 0.0
      %660 = vmatpush1.msra.mxu0 0.0
      %661 = vmatprep.subr.mxu0 0.0
      %662 = vmatpush1.msra.mxu0 0.0
      %663 = vmatprep.subr.mxu0 0.0
      %664 = vmatpush1.msra.mxu0 0.0
      %665 = vmatprep.subr.mxu0 0.0
      %666 = vmatpush1.msra.mxu0 0.0
      %667 = vmatprep.subr.mxu0 0.0
      %668 = vmatpush1.msra.mxu0 0.0
      %669 = vmatprep.subr.mxu0 0.0
      %670 = vmatpush1.msra.mxu0 0.0
      %671 = vmatprep.subr.mxu0 0.0
      %672 = vmatpush1.msra.mxu0 0.0
      %673 = vmatprep.subr.mxu0 0.0
      %674 = vmatpush1.msra.mxu0 0.0
      %675 = vmatprep.subr.mxu0 0.0
      %676 = vmatpush1.msra.mxu0 0.0
      %677 = vmatprep.subr.mxu0 0.0
      %678 = vmatpush1.msra.mxu0 0.0
      %679 = vmatprep.subr.mxu0 0.0
      %680 = vmatpush1.msra.mxu0 %v641
      %681 = vmatprep.subr.mxu0 0.0
      %682 = vmatpush2.msra.mxu0 0.0
      %683 = vmatprep.subr.mxu0 0.0
      %684 = vmatpush2.msra.mxu0 0.0
      %685 = vmatprep.subr.mxu0 0.0
      %686 = vmatpush2.msra.mxu0 0.0
      %687 = vmatprep.subr.mxu0 0.0
      %688 = vmatpush2.msra.mxu0 0.0
      %689 = vmatprep.subr.mxu0 0.0
      %690 = vmatpush2.msra.mxu0 0.0
      %691 = vmatprep.subr.mxu0 0.0
      %692 = vmatpush2.msra.mxu0 0.0
      %693 = vmatprep.subr.mxu0 0.0
      %694 = vmatpush2.msra.mxu0 0.0
      %695 = vmatprep.subr.mxu0 0.0
      %696 = vmatpush2.msra.mxu0 0.0
      %697 = vmatprep.subr.mxu0 0.0
      %698 = vmatpush2.msra.mxu0 0.0
      %699 = vmatprep.subr.mxu0 0.0
      %700 = vmatpush2.msra.mxu0 0.0
      %701 = vmatprep.subr.mxu0 0.0
      %702 = vmatpush2.msra.mxu0 0.0
      %703 = vmatprep.subr.mxu0 0.0
      %704 = vmatpush2.msra.mxu0 0.0
      %705 = vmatprep.subr.mxu0 0.0
      %706 = vmatpush2.msra.mxu0 0.0
      %707 = vmatprep.subr.mxu0 0.0
      %708 = vmatpush2.msra.mxu0 0.0
      %709 = vmatprep.subr.mxu0 0.0
      %710 = vmatpush2.msra.mxu0 0.0
      %711 = vmatprep.subr.mxu0 0.0
      %712 = vmatpush2.msra.mxu0 0.0
      %713 = vmatprep.mubr.f32.mxu0 0.0
      %714 = vmatmul.mubr.f32.gmra.mxu0 %v644
      %v715 = vpop.f32.mrf.mxu0
      %v716 = vadd.f32 0.0, %v715
      %v717 = vpop.f32.mrf.mxu0
      %718 = vmatprep.mubr.f32.mxu0 0.0
      %719 = vmatmul.mubr.f32.gmra.mxu0 %v647
      %v720 = vpop.f32.mrf.mxu0
      %v721 = vadd.f32 0.0, %v720
      %v722 = vpop.f32.mrf.mxu0
      %723 = vdwg.mxu0
      %v724 = vld [vmem:[%s4] sm:$0xff]
      %v725 = vld [vmem:[%s4 + $0x8] sm:$0xff]
      %v726 = vld [vmem:[%s4 + $0x10] sm:$0xff]
      %v727 = vld [vmem:[%s4 + $0x18] sm:$0xff]
      %v728 = vld [vmem:[%s5] sm:$0xff]
      %v729 = vld [vmem:[%s5 + $0x8] sm:$0xff]
      %v730 = vld [vmem:[%s5 + $0x10] sm:$0xff]
      %v731 = vld [vmem:[%s5 + $0x18] sm:$0xff]
      %v733 = vsel %vm529, %v728, 0
      %v736 = vsel %vm529, %v729, 0
      %v739 = vsel %vm529, %v730, 0
      %v742 = vsel %vm529, %v731, 0
      %744 = vmatprep.subr.mxu0 0.0
      %745 = vmatpush1.msra.mxu0 0.0
      %746 = vmatprep.subr.mxu0 0.0
      %747 = vmatpush1.msra.mxu0 0.0
      %748 = vmatprep.subr.mxu0 0.0
      %749 = vmatpush1.msra.mxu0 0.0
      %750 = vmatprep.subr.mxu0 0.0
      %751 = vmatpush1.msra.mxu0 0.0
      %752 = vmatprep.subr.mxu0 0.0
      %753 = vmatpush1.msra.mxu0 0.0
      %754 = vmatprep.subr.mxu0 0.0
      %755 = vmatpush1.msra.mxu0 0.0
      %756 = vmatprep.subr.mxu0 0.0
      %757 = vmatpush1.msra.mxu0 0.0
      %758 = vmatprep.subr.mxu0 0.0
      %759 = vmatpush1.msra.mxu0 0.0
      %760 = vmatprep.subr.mxu0 0.0
      %761 = vmatpush1.msra.mxu0 0.0
      %762 = vmatprep.subr.mxu0 0.0
      %763 = vmatpush1.msra.mxu0 0.0
      %764 = vmatprep.subr.mxu0 0.0
      %765 = vmatpush1.msra.mxu0 0.0
      %766 = vmatprep.subr.mxu0 0.0
      %767 = vmatpush1.msra.mxu0 0.0
      %768 = vmatprep.subr.mxu0 0.0
      %769 = vmatpush1.msra.mxu0 0.0
      %770 = vmatprep.subr.mxu0 0.0
      %771 = vmatpush1.msra.mxu0 0.0
      %772 = vmatprep.subr.mxu0 0.0
      %773 = vmatpush1.msra.mxu0 %v721
      %774 = vmatprep.subr.mxu0 0.0
      %775 = vmatpush1.msra.mxu0 %v716
      %776 = vmatprep.subr.mxu0 0.0
      %777 = vmatpush2.msra.mxu0 0.0
      %778 = vmatprep.subr.mxu0 0.0
      %779 = vmatpush2.msra.mxu0 0.0
      %780 = vmatprep.subr.mxu0 0.0
      %781 = vmatpush2.msra.mxu0 0.0
      %782 = vmatprep.subr.mxu0 0.0
      %783 = vmatpush2.msra.mxu0 0.0
      %784 = vmatprep.subr.mxu0 0.0
      %785 = vmatpush2.msra.mxu0 0.0
      %786 = vmatprep.subr.mxu0 0.0
      %787 = vmatpush2.msra.mxu0 0.0
      %788 = vmatprep.subr.mxu0 0.0
      %789 = vmatpush2.msra.mxu0 0.0
      %790 = vmatprep.subr.mxu0 0.0
      %791 = vmatpush2.msra.mxu0 0.0
      %792 = vmatprep.subr.mxu0 0.0
      %793 = vmatpush2.msra.mxu0 0.0
      %794 = vmatprep.subr.mxu0 0.0
      %795 = vmatpush2.msra.mxu0 0.0
      %796 = vmatprep.subr.mxu0 0.0
      %797 = vmatpush2.msra.mxu0 0.0
      %798 = vmatprep.subr.mxu0 0.0
      %799 = vmatpush2.msra.mxu0 0.0
      %800 = vmatprep.subr.mxu0 0.0
      %801 = vmatpush2.msra.mxu0 0.0
      %802 = vmatprep.subr.mxu0 0.0
      %803 = vmatpush2.msra.mxu0 0.0
      %804 = vmatprep.subr.mxu0 0.0
      %805 = vmatpush2.msra.mxu0 0.0
      %806 = vmatprep.subr.mxu0 0.0
      %807 = vmatpush2.msra.mxu0 0.0
      %808 = vmatprep.mubr.f32.mxu0 0.0
      %809 = vmatmul.mubr.f32.gmra.mxu0 %v733
      %v810 = vpop.f32.mrf.mxu0
      %v811 = vadd.f32 0.0, %v810
      %v812 = vpop.f32.mrf.mxu0
      %813 = vmatprep.mubr.f32.mxu0 0.0
      %814 = vmatmul.mubr.f32.gmra.mxu0 %v736
      %v815 = vpop.f32.mrf.mxu0
      %v816 = vadd.f32 0.0, %v815
      %v817 = vpop.f32.mrf.mxu0
      %818 = vmatprep.mubr.f32.mxu0 0.0
      %819 = vmatmul.mubr.f32.gmra.mxu0 %v739
      %v820 = vpop.f32.mrf.mxu0
      %v821 = vadd.f32 0.0, %v820
      %v822 = vpop.f32.mrf.mxu0
      %823 = vmatprep.mubr.f32.mxu0 0.0
      %824 = vmatmul.mubr.f32.gmra.mxu0 %v742
      %v825 = vpop.f32.mrf.mxu0
      %v826 = vadd.f32 0.0, %v825
      %v827 = vpop.f32.mrf.mxu0
      %828 = vdwg.mxu0
      %v830 = vsel %vm642, %v724, 0
      %v833 = vsel %vm642, %v725, 0
      %v836 = vsel %vm642, %v726, 0
      %v839 = vsel %vm642, %v727, 0
      %841 = vmatprep.subr.mxu0 0.0
      %842 = vmatpush1.msra.mxu0 0.0
      %843 = vmatprep.subr.mxu0 0.0
      %844 = vmatpush1.msra.mxu0 0.0
      %845 = vmatprep.subr.mxu0 0.0
      %846 = vmatpush1.msra.mxu0 0.0
      %847 = vmatprep.subr.mxu0 0.0
      %848 = vmatpush1.msra.mxu0 0.0
      %849 = vmatprep.subr.mxu0 0.0
      %850 = vmatpush1.msra.mxu0 0.0
      %851 = vmatprep.subr.mxu0 0.0
      %852 = vmatpush1.msra.mxu0 0.0
      %853 = vmatprep.subr.mxu0 0.0
      %854 = vmatpush1.msra.mxu0 0.0
      %855 = vmatprep.subr.mxu0 0.0
      %856 = vmatpush1.msra.mxu0 0.0
      %857 = vmatprep.subr.mxu0 0.0
      %858 = vmatpush1.msra.mxu0 0.0
      %859 = vmatprep.subr.mxu0 0.0
      %860 = vmatpush1.msra.mxu0 0.0
      %861 = vmatprep.subr.mxu0 0.0
      %862 = vmatpush1.msra.mxu0 0.0
      %863 = vmatprep.subr.mxu0 0.0
      %864 = vmatpush1.msra.mxu0 0.0
      %865 = vmatprep.subr.mxu0 0.0
      %866 = vmatpush1.msra.mxu0 0.0
      %867 = vmatprep.subr.mxu0 0.0
      %868 = vmatpush1.msra.mxu0 0.0
      %869 = vmatprep.subr.mxu0 0.0
      %870 = vmatpush1.msra.mxu0 0.0
      %871 = vmatprep.subr.mxu0 0.0
      %872 = vmatpush1.msra.mxu0 %v431
      %873 = vmatprep.subr.mxu0 0.0
      %874 = vmatpush2.msra.mxu0 0.0
      %875 = vmatprep.subr.mxu0 0.0
      %876 = vmatpush2.msra.mxu0 0.0
      %877 = vmatprep.subr.mxu0 0.0
      %878 = vmatpush2.msra.mxu0 0.0
      %879 = vmatprep.subr.mxu0 0.0
      %880 = vmatpush2.msra.mxu0 0.0
      %881 = vmatprep.subr.mxu0 0.0
      %882 = vmatpush2.msra.mxu0 0.0
      %883 = vmatprep.subr.mxu0 0.0
      %884 = vmatpush2.msra.mxu0 0.0
      %885 = vmatprep.subr.mxu0 0.0
      %886 = vmatpush2.msra.mxu0 0.0
      %887 = vmatprep.subr.mxu0 0.0
      %888 = vmatpush2.msra.mxu0 0.0
      %889 = vmatprep.subr.mxu0 0.0
      %890 = vmatpush2.msra.mxu0 0.0
      %891 = vmatprep.subr.mxu0 0.0
      %892 = vmatpush2.msra.mxu0 0.0
      %893 = vmatprep.subr.mxu0 0.0
      %894 = vmatpush2.msra.mxu0 0.0
      %895 = vmatprep.subr.mxu0 0.0
      %896 = vmatpush2.msra.mxu0 0.0
      %897 = vmatprep.subr.mxu0 0.0
      %898 = vmatpush2.msra.mxu0 0.0
      %899 = vmatprep.subr.mxu0 0.0
      %900 = vmatpush2.msra.mxu0 0.0
      %901 = vmatprep.subr.mxu0 0.0
      %902 = vmatpush2.msra.mxu0 0.0
      %903 = vmatprep.subr.mxu0 0.0
      %904 = vmatpush2.msra.mxu0 0.0
      %905 = vmatprep.mubr.f32.mxu0 0.0
      %906 = vmatmul.mubr.f32.gmra.mxu0 %v830
      %v907 = vpop.f32.mrf.mxu0
      %v908 = vadd.f32 %v811, %v907
      %v909 = vpop.f32.mrf.mxu0
      %910 = vmatprep.mubr.f32.mxu0 0.0
      %911 = vmatmul.mubr.f32.gmra.mxu0 %v833
      %v912 = vpop.f32.mrf.mxu0
      %v913 = vadd.f32 %v816, %v912
      %v914 = vpop.f32.mrf.mxu0
      %915 = vmatprep.mubr.f32.mxu0 0.0
      %916 = vmatmul.mubr.f32.gmra.mxu0 %v836
      %v917 = vpop.f32.mrf.mxu0
      %v918 = vadd.f32 %v821, %v917
      %v919 = vpop.f32.mrf.mxu0
      %920 = vmatprep.mubr.f32.mxu0 0.0
      %921 = vmatmul.mubr.f32.gmra.mxu0 %v839
      %v922 = vpop.f32.mrf.mxu0
      %v923 = vadd.f32 %v826, %v922
      %v924 = vpop.f32.mrf.mxu0
      %925 = vdwg.mxu0
      %926 = vst.msk [vmem:[%s385] sm:$0xff] %vm529, %v908
      %927 = vst.msk [vmem:[%s385 + $0x8] sm:$0xff] %vm529, %v913
      %928 = vst.msk [vmem:[%s385 + $0x10] sm:$0xff] %vm529, %v918
      %929 = vst.msk [vmem:[%s385 + $0x18] sm:$0xff] %vm529, %v923
      %v930 = vsel %vm529, %v908, 0.0
      %931 = vadd.xlane.f32.xlu0 %v930
      %v932 = vpop.xlane.xlu0 %931
      %v933 = vsel %vm529, %v913, 0.0
      %934 = vadd.xlane.f32.xlu0 %v933
      %v935 = vpop.xlane.xlu0 %934
      %v936 = vsel %vm529, %v918, 0.0
      %937 = vadd.xlane.f32.xlu0 %v936
      %v938 = vpop.xlane.xlu0 %937
      %v939 = vsel %vm529, %v923, 0.0
      %940 = vadd.xlane.f32.xlu0 %v939
      %v941 = vpop.xlane.xlu0 %940
      %v942 = vmul.f32 %v908, %v908
      %v943 = vmul.f32 %v913, %v913
      %v944 = vmul.f32 %v918, %v918
      %v945 = vmul.f32 %v923, %v923
      %v946 = vsel %vm529, %v942, 0.0
      %947 = vadd.xlane.f32.xlu0 %v946
      %v948 = vpop.xlane.xlu0 %947
      %v949 = vsel %vm529, %v943, 0.0
      %950 = vadd.xlane.f32.xlu0 %v949
      %v951 = vpop.xlane.xlu0 %950
      %v952 = vsel %vm529, %v944, 0.0
      %953 = vadd.xlane.f32.xlu0 %v952
      %v954 = vpop.xlane.xlu0 %953
      %v955 = vsel %vm529, %v945, 0.0
      %956 = vadd.xlane.f32.xlu0 %v955
      %v957 = vpop.xlane.xlu0 %956
      %vm958 = vcmask 7168
      %v959 = vsel %vm958, %v932, %v948
      %v960 = vsel %vm958, %v935, %v951
      %v961 = vsel %vm958, %v938, %v954
      %v962 = vsel %vm958, %v941, %v957
      %vm963 = vcmask 15360
      %964 = vst.msk [vmem:[%s394] sm:$0xff] %vm963, %v959
      %965 = vst.msk [vmem:[%s394 + $0x8] sm:$0xff] %vm963, %v960
      %966 = vst.msk [vmem:[%s394 + $0x10] sm:$0xff] %vm963, %v961
      %967 = vst.msk [vmem:[%s394 + $0x18] sm:$0xff] %vm963, %v962
      %p968 = scmp.lt.s32.totalorder %s23, 1
      %s969 = scalar_select %p968, %s23, 1
      %p970 = scmp.lt.s32.totalorder %s24, 0
      %s971 = scalar_select %p970, %s24, 0
      %s972 = smul.addr %s969, 4
      %s973 = sadd.s32 %s971, %s972
      %s974 = smul.addr %s973, 8
      %s975 = scalar_lea.vmem %s6, %s974
      %p976 = scmp.lt.s32.totalorder %s23, 1
      %s977 = scalar_select %p976, %s23, 1
      %p978 = scmp.lt.s32.totalorder %s24, 0
      %s979 = scalar_select %p978, %s24, 0
      %s980 = smul.addr %s979, 4
      %s981 = smul.addr %s977, 4
      %s982 = sadd.s32 %s980, %s981
      %s983 = smul.addr %s982, 8
      %s984 = scalar_lea.vmem %s7, %s983
      // Predicated region
      $region45: #{tpu_custom_call.1} parent=43 // pred_check
        %p985 = pneg %p201
      $region46: #{tpu_custom_call.1} parent=43 // pred_check_branch
        %987 = sbr.rel (%p985) target = $region48
      $region47: #{tpu_custom_call.1} parent=43 // pred_region
        _
      $region48: #{tpu_custom_call.1} parent=43 // pred_fallthru
        _
      // Predicated region
      $region49: #{tpu_custom_call.1} parent=43 // pred_check
        %p988 = pneg %p229
      $region50: #{tpu_custom_call.1} parent=43 // pred_check_branch
        %990 = sbr.rel (%p988) target = $region52
      $region51: #{tpu_custom_call.1} parent=43 // pred_region
        _
      $region52: #{tpu_custom_call.1} parent=43 // pred_fallthru
        _
    $region44: #{tpu_custom_call.1} parent=5 // pred_fallthru
      _
    %p991 = scmp.le.s32.totalorder 2, %s14
    // Predicated region
    $region53: #{tpu_custom_call.1} parent=5 // pred_check
      %p992 = pneg %p991
    $region54: #{tpu_custom_call.1} parent=5 // pred_check_branch
      %994 = sbr.rel (%p992) target = $region56
    $region55: #{tpu_custom_call.1} parent=5 // pred_region
      %s995 = ssub.s32 %s14, 2
      // Predicated region
      $region57: #{tpu_custom_call.1} parent=55 // pred_check
        %p996 = pneg %p207
      $region58: #{tpu_custom_call.1} parent=55 // pred_check_branch
        %998 = sbr.rel (%p996) target = $region60
      $region59: #{tpu_custom_call.1} parent=55 // pred_region
        %p999 = scmp.lt.s32.totalorder %s25, 1
        %s1000 = scalar_select %p999, %s25, 1
        %p1001 = scmp.lt.s32.totalorder %s26, 0
        %s1002 = scalar_select %p1001, %s26, 0
        %s1003 = smul.addr %s1000, 4
        %s1004 = sadd.s32 %s1002, %s1003
        %s1005 = smul.addr %s1004, 8
        %s1006 = scalar_lea.vmem %s6, %s1005
      $region60: #{tpu_custom_call.1} parent=55 // pred_fallthru
        _
      // Predicated region
      $region61: #{tpu_custom_call.1} parent=55 // pred_check
        %p1007 = pneg %p235
      $region62: #{tpu_custom_call.1} parent=55 // pred_check_branch
        %1009 = sbr.rel (%p1007) target = $region64
      $region63: #{tpu_custom_call.1} parent=55 // pred_region
        %p1010 = scmp.lt.s32.totalorder %s25, 1
        %s1011 = scalar_select %p1010, %s25, 1
        %p1012 = scmp.lt.s32.totalorder %s26, 0
        %s1013 = scalar_select %p1012, %s26, 0
        %s1014 = smul.addr %s1013, 4
        %s1015 = smul.addr %s1011, 4
        %s1016 = sadd.s32 %s1014, %s1015
        %s1017 = smul.addr %s1016, 8
        %s1018 = scalar_lea.vmem %s7, %s1017
      $region64: #{tpu_custom_call.1} parent=55 // pred_fallthru
        _
    $region56: #{tpu_custom_call.1} parent=5 // pred_fallthru
      _
  $region6: #{tpu_custom_call.1} parent=0 // loop_footer
    %s18 = sadd.s32 1, %s14
  $region7: #{tpu_custom_call.1} parent=0 // loop_footer_branch
    %13 = sbr.rel target = $region3
  $region8: #{tpu_custom_call.1} parent=0 // loop_exit
    _

</llo_original>
